<compile_context>
chip_gen: v5e
topology: v5e:2x2
jax: 0.10.0
libtpu: 0.0.40
codegen_flags: <defaults>
</compile_context>

<pallas_src>
import functools

import jax
import jax.numpy as jnp
from jax.experimental import pallas as pl
from jax.experimental.pallas import tpu as pltpu

EPS = 1e-5
BF16 = jnp.bfloat16
F32 = jnp.float32

_CPARAMS = pltpu.CompilerParams(
    dimension_semantics=("parallel",),
    vmem_limit_bytes=32 * 1024 * 1024,
)


# ---------------------------------------------------------------------------
# Stage kernels.  Each fuses: normalize(previous BN as scale/shift) + ReLU,
# the next matmul (bf16 MXU, f32 accumulate), bf16 downcast store, and
# single-pass per-tile sum / sum-of-squares for the next BatchNorm.
# ---------------------------------------------------------------------------
def _stage1_kernel(feat_ref, w_ref, h1_ref, ha_ref, sum_ref, sq_ref, *, split):
    """h_cat = feat @ [W1 | Wa1]; split into h1/ha; per-tile column stats of slab."""
    h = jnp.dot(feat_ref[...], w_ref[...], preferred_element_type=F32)  # (tn, 512) f32
    h1_ref[...] = h[:, :split].astype(BF16)
    ha_ref[...] = h[:, split:].astype(BF16)
    sum_ref[...] = jnp.sum(h, axis=0, keepdims=True)[None]
    sq_ref[...] = jnp.sum(h * h, axis=0, keepdims=True)[None]


def _stage2_kernel(h1_ref, s1_ref, t1_ref, w2_ref, h2_ref, sum_ref, sq_ref):
    """x1 = relu(bn1(h1)); h2 = x1 @ W2; per-tile stats of h2."""
    x1 = jnp.maximum(h1_ref[...].astype(F32) * s1_ref[...] + t1_ref[...], 0.0)
    h2 = jnp.dot(x1.astype(BF16), w2_ref[...], preferred_element_type=F32)
    h2_ref[...] = h2.astype(BF16)
    sum_ref[...] = jnp.sum(h2, axis=0, keepdims=True)[None]
    sq_ref[...] = jnp.sum(h2 * h2, axis=0, keepdims=True)[None]


def _stage3_kernel(h1_ref, s1_ref, t1_ref, h2_ref, s2_ref, t2_ref, c1_ref, w3_ref,
                   h3_ref, sum_ref, sq_ref):
    """Recompute x1, x2; m = c1 mix; h3 = m @ W3; per-tile stats of h3."""
    x1 = jnp.maximum(h1_ref[...].astype(F32) * s1_ref[...] + t1_ref[...], 0.0)
    x2 = jnp.maximum(h2_ref[...].astype(F32) * s2_ref[...] + t2_ref[...], 0.0)
    m = c1_ref[0] * x1 + c1_ref[1] * x2
    h3 = jnp.dot(m.astype(BF16), w3_ref[...], preferred_element_type=F32)
    h3_ref[...] = h3.astype(BF16)
    sum_ref[...] = jnp.sum(h3, axis=0, keepdims=True)[None]
    sq_ref[...] = jnp.sum(h3 * h3, axis=0, keepdims=True)[None]


def _stage4_kernel(h1_ref, s1_ref, t1_ref, h2_ref, s2_ref, t2_ref,
                   h3_ref, s3_ref, t3_ref, c2_ref,
                   ha_ref, sa_ref, ta_ref, wa2_ref, out_ref):
    """Recompute x1..x3; y = c2 mix; gate = hardsigmoid(relu(bn_a(ha)) @ Wa2); out."""
    x1 = jnp.maximum(h1_ref[...].astype(F32) * s1_ref[...] + t1_ref[...], 0.0)
    x2 = jnp.maximum(h2_ref[...].astype(F32) * s2_ref[...] + t2_ref[...], 0.0)
    x3 = jnp.maximum(h3_ref[...].astype(F32) * s3_ref[...] + t3_ref[...], 0.0)
    y = c2_ref[0] * x1 + c2_ref[1] * x2 + c2_ref[2] * x3

    g = jnp.maximum(ha_ref[...].astype(F32) * sa_ref[...] + ta_ref[...], 0.0)
    g = jnp.dot(g.astype(BF16), wa2_ref[...], preferred_element_type=F32)
    g = jnp.clip(g * (1.0 / 6.0) + 0.5, 0.0, 1.0)          # Hardsigmoid

    out_ref[...] = (y * g).astype(out_ref.dtype)


# ---------------------------------------------------------------------------
# Host-side orchestration.
# ---------------------------------------------------------------------------
def _bn_scale_shift(col_sum, col_sq, n_rows, gamma, beta, eps=EPS):
    """Fold training-mode BatchNorm into one per-column scale/shift (tiny (1,H) math)."""
    mean = col_sum / n_rows
    var = col_sq / n_rows - mean * mean            # biased (training-mode) variance
    s = gamma * jax.lax.rsqrt(var + eps)
    t = beta - mean * s
    return s, t


def nn_edge_forward(feat, params, *, tile_n=512):
    """Forward pass of nn_edge, executed as 4 N-tiled Pallas stages."""
    N, in_n = feat.shape
    out_n = params["w1"].shape[1]
    hid_a = params["wa1"].shape[1]
    cat_n = out_n + hid_a

    # Row tile: largest that fits the pipeline's double-buffer budget.  Stage 4
    # streams ~4 KB/row in bf16 + a 1.5 KB/row f32 output, so tile_n = 1024 is
    # ~11 MiB of live blocks -- safe under the 32 MiB scoped limit on v7x's
    # 64 MiB VMEM; v5e/v6e (128 MiB) have even more headroom.
    tile_n = min(tile_n, 1024, N)
    assert N % tile_n == 0, "demo requires N divisible by tile_n"
    # TODO(synk): mask the rows of a ragged last tile (both stores and stats)
    # to support N that is not a multiple of tile_n; keep the divisor at the true N.
    num_tiles = N // tile_n
    grid = (num_tiles,)

    def row_spec(width):                      # per-row-tile blocks (double-buffered)
        return pl.BlockSpec((tile_n, width), lambda i: (i, 0))

    def resident_spec(shape):                 # weights / BN vectors stay VMEM-resident
        return pl.BlockSpec(shape, lambda i: (0,) * len(shape))

    def stat_spec(width):                     # per-tile partial-stats blocks
        return pl.BlockSpec((1, 1, width), lambda i: (i, 0, 0))

    def stat_shape(width):
        return jax.ShapeDtypeStruct((num_tiles, 1, width), F32)

    smem_spec = pl.BlockSpec(memory_space=pltpu.MemorySpace.SMEM)

    # bf16 casts: activations + weights feed the MXU bf16 fast path; weight
    # quantization is tiny and the pipeline is HBM-bound anyway.
    feat_b = feat.astype(BF16)
    w_cat = jnp.concatenate([params["w1"], params["wa1"]], axis=1).astype(BF16)
    w2_b = params["w2"].astype(BF16)
    w3_b = params["w3"].astype(BF16)
    wa2_b = params["wa2"].astype(BF16)

    # ---- stage 1: one fused matmul feat @ [W1 | Wa1] + slab stats ----------
    h1, ha, sum1p, sq1p = pl.pallas_call(
        functools.partial(_stage1_kernel, split=out_n),
        grid=grid,
        in_specs=[row_spec(in_n), resident_spec((in_n, cat_n))],
        out_specs=(row_spec(out_n), row_spec(hid_a),
                   stat_spec(cat_n), stat_spec(cat_n)),
        out_shape=(jax.ShapeDtypeStruct((N, out_n), BF16),
                   jax.ShapeDtypeStruct((N, hid_a), BF16),
                   stat_shape(cat_n), stat_shape(cat_n)),
        compiler_params=_CPARAMS,
    )(feat_b, w_cat)

    sum_cat = jnp.sum(sum1p, axis=0)           # (1, cat_n)
    sq_cat = jnp.sum(sq1p, axis=0)
    s1, t1 = _bn_scale_shift(sum_cat[:, :out_n], sq_cat[:, :out_n], N,
                             params["g1"], params["b1"])
    sa, ta = _bn_scale_shift(sum_cat[:, out_n:], sq_cat[:, out_n:], N,
                             params["ga"], params["ba"])

    # ---- stage 2: x1 = relu(bn1(h1)) (not stored); h2 = x1 @ W2 + stats ----
    h2, sum2p, sq2p = pl.pallas_call(
        _stage2_kernel,
        grid=grid,
        in_specs=[row_spec(out_n),
                  resident_spec((1, out_n)), resident_spec((1, out_n)),
                  resident_spec((out_n, out_n))],
        out_specs=(row_spec(out_n), stat_spec(out_n), stat_spec(out_n)),
        out_shape=(jax.ShapeDtypeStruct((N, out_n), BF16),
                   stat_shape(out_n), stat_shape(out_n)),
        compiler_params=_CPARAMS,
    )(h1, s1, t1, w2_b)

    s2, t2 = _bn_scale_shift(jnp.sum(sum2p, axis=0), jnp.sum(sq2p, axis=0), N,
                             params["g2"], params["b2"])

    # ---- stage 3: recompute x1, x2; conv1 mix; h3 = m @ W3 + stats ---------
    h3, sum3p, sq3p = pl.pallas_call(
        _stage3_kernel,
        grid=grid,
        in_specs=[row_spec(out_n),
                  resident_spec((1, out_n)), resident_spec((1, out_n)),
                  row_spec(out_n),
                  resident_spec((1, out_n)), resident_spec((1, out_n)),
                  smem_spec,
                  resident_spec((out_n, out_n))],
        out_specs=(row_spec(out_n), stat_spec(out_n), stat_spec(out_n)),
        out_shape=(jax.ShapeDtypeStruct((N, out_n), BF16),
                   stat_shape(out_n), stat_shape(out_n)),
        compiler_params=_CPARAMS,
    )(h1, s1, t1, h2, s2, t2, params["c1"], w3_b)

    s3, t3 = _bn_scale_shift(jnp.sum(sum3p, axis=0), jnp.sum(sq3p, axis=0), N,
                             params["g3"], params["b3"])

    # ---- stage 4: recompute x1..x3, conv2 mix, attention gate, output ------
    # Output kept in feat.dtype (f32) to match the PyTorch module; switch the
    # out_shape dtype to bf16 if the consumer allows (halves final writeback).
    out = pl.pallas_call(
        _stage4_kernel,
        grid=grid,
        in_specs=[row_spec(out_n),
                  resident_spec((1, out_n)), resident_spec((1, out_n)),
                  row_spec(out_n),
                  resident_spec((1, out_n)), resident_spec((1, out_n)),
                  row_spec(out_n),
                  resident_spec((1, out_n)), resident_spec((1, out_n)),
                  smem_spec,
                  row_spec(hid_a),
                  resident_spec((1, hid_a)), resident_spec((1, hid_a)),
                  resident_spec((hid_a, out_n))],
        out_specs=row_spec(out_n),
        out_shape=jax.ShapeDtypeStruct((N, out_n), feat.dtype),
        compiler_params=_CPARAMS,
    )(h1, s1, t1, h2, s2, t2, h3, s3, t3, params["c2"], ha, sa, ta, wa2_b)

    return out


# ---------------------------------------------------------------------------
# Parameters and pure-JAX (f32) reference.
# ---------------------------------------------------------------------------
def init_params(key, in_n, out_n, ratio=3):
    hid_a = out_n // ratio
    ks = jax.random.split(key, 15)

    def linear_w(k, fan_in, fan_out):
        b = fan_in ** -0.5                      # PyTorch Linear default init
        return jax.random.uniform(k, (fan_in, fan_out), F32, -b, b)

    def bn_affine(kg, kb, n):
        gamma = jax.random.uniform(kg, (1, n), F32, 0.5, 1.5)
        beta = 0.1 * jax.random.normal(kb, (1, n), F32)
        return gamma, beta

    g1, b1 = bn_affine(ks[7], ks[8], out_n)
    g2, b2 = bn_affine(ks[9], ks[10], out_n)
    g3, b3 = bn_affine(ks[11], ks[12], out_n)
    ga, ba = bn_affine(ks[13], ks[14], hid_a)

    # Linear biases omitted: every Linear feeds straight into a training-mode
    # BatchNorm (mean subtraction cancels them), and edge_Attention.layer2 is
    # bias=False in the PyTorch source.
    return dict(
        w1=linear_w(ks[0], in_n, out_n),
        w2=linear_w(ks[1], out_n, out_n),
        w3=linear_w(ks[2], out_n, out_n),
        wa1=linear_w(ks[3], in_n, hid_a),
        wa2=linear_w(ks[4], hid_a, out_n),
        c1=jax.random.uniform(ks[5], (2,), F32, -(2 ** -0.5), 2 ** -0.5),
        c2=jax.random.uniform(ks[6], (3,), F32, -(3 ** -0.5), 3 ** -0.5),
        g1=g1, b1=b1, g2=g2, b2=b2, g3=g3, b3=b3, ga=ga, ba=ba,
    )


def nn_edge_reference(feat, p, eps=EPS):
    dot = functools.partial(jnp.dot, precision=jax.lax.Precision.HIGHEST)

    def bn(h, gamma, beta):
        mean = jnp.mean(h, axis=0, keepdims=True)
        var = jnp.mean((h - mean) ** 2, axis=0, keepdims=True)   # biased, two-pass
        return (h - mean) / jnp.sqrt(var + eps) * gamma + beta

    x1 = jnp.maximum(bn(dot(feat, p["w1"]), p["g1"], p["b1"]), 0.0)
    x2 = jnp.maximum(bn(dot(x1, p["w2"]), p["g2"], p["b2"]), 0.0)
    m = p["c1"][0] * x1 + p["c1"][1] * x2
    x3 = jnp.maximum(bn(dot(m, p["w3"]), p["g3"], p["b3"]), 0.0)
    y = p["c2"][0] * x1 + p["c2"][1] * x2 + p["c2"][2] * x3
    ga = jnp.maximum(bn(dot(feat, p["wa1"]), p["ga"], p["ba"]), 0.0)
    gate = jnp.clip(dot(ga, p["wa2"]) / 6.0 + 0.5, 0.0, 1.0)    # Hardsigmoid
    return y * gate


if __name__ == "__main__":
    # Small demo shapes consistent with the module: N edges, input_n -> output_n,
    # ratio=3.  output_n is a multiple of 3 and of 128 so the attention hidden
    # (output_n // 3 = 128), the fused (out_n + hid_a)=512 slab, and all outputs
    # are lane-dense.  tile_n=128 here just to exercise the multi-tile partial
    # statistics path; production default is 512.
    N, in_n, out_n = 256, 64, 384

    key = jax.random.PRNGKey(0)
    kf, kp = jax.random.split(key)
    feat = jax.random.normal(kf, (N, in_n), F32)
    params = init_params(kp, in_n, out_n, ratio=3)

    out = nn_edge_forward(feat, params, tile_n=128)   # grid of 2 row tiles
    out = jax.block_until_ready(out)

    ref = nn_edge_reference(feat, params)
    assert out.shape == (N, out_n)
    # Tolerance accounts for bf16 intermediate storage / bf16 MXU inputs and the
    # single-pass E[h^2]-E[h]^2 variance vs the f32 two-pass reference, propagated
    # through four stacked BatchNorms (typical |err| ~ 5e-3, worst-case ~2e-2).
    assert jnp.allclose(out, ref, atol=5e-2, rtol=5e-2), (
        "mismatch vs reference: max abs diff "
        f"{jnp.max(jnp.abs(out - ref)):.3e}")

    print("KERNEL_OK")
</pallas_src>

<mosaic_0001>
module attributes {stable_mosaic.version = 11 : i64} {
  func.func @_stage1_kernel(%arg0: i32, %arg1: memref<128x64xbf16, #tpu.memory_space<vmem>>, %arg2: memref<64x512xbf16, #tpu.memory_space<vmem>>, %arg3: memref<128x384xbf16, #tpu.memory_space<vmem>>, %arg4: memref<128x128xbf16, #tpu.memory_space<vmem>>, %arg5: memref<1x1x512xf32, #tpu.memory_space<vmem>>, %arg6: memref<1x1x512xf32, #tpu.memory_space<vmem>>) attributes {dimension_semantics = [#tpu.dimension_semantics<parallel>], iteration_bounds = array<i64: 2>, scalar_prefetch = 0 : i64, scratch_operands = 0 : i64, tpu.core_type = #tpu.core_type<tc>, window_params = [{transform_indices = @transform_0, window_bounds = array<i64: 128, 64>}, {pipeline_mode = #tpu.pipeline_mode<synchronous>, transform_indices = @transform_1, window_bounds = array<i64: 64, 512>}, {transform_indices = @transform_2, window_bounds = array<i64: 128, 384>}, {transform_indices = @transform_3, window_bounds = array<i64: 128, 128>}, {transform_indices = @transform_4, window_bounds = array<i64: 1, 1, 512>}, {transform_indices = @transform_5, window_bounds = array<i64: 1, 1, 512>}]} {
    %c0 = arith.constant 0 : index
    %c0_0 = arith.constant 0 : index
    %0 = vector.load %arg1[%c0, %c0_0] : memref<128x64xbf16, #tpu.memory_space<vmem>>, vector<128x64xbf16>
    %c0_1 = arith.constant 0 : index
    %c0_2 = arith.constant 0 : index
    %1 = vector.load %arg2[%c0_1, %c0_2] : memref<64x512xbf16, #tpu.memory_space<vmem>>, vector<64x512xbf16>
    %cst = arith.constant dense<0.000000e+00> : vector<128x512xf32>
    %2 = tpu.matmul %0, %1, %cst {dimension_numbers = #tpu.dot_dimension_numbers<[1], [0], [0], [1], [0, 0, 1, 1], [], []>} : vector<128x64xbf16>, vector<64x512xbf16>, vector<128x512xf32> -> vector<128x512xf32>
    %3 = vector.extract_strided_slice %2 {offsets = [0, 0], sizes = [128, 384], strides = [1, 1]} : vector<128x512xf32> to vector<128x384xf32>
    %4 = arith.truncf %3 : vector<128x384xf32> to vector<128x384xbf16>
    %c0_3 = arith.constant 0 : index
    %c0_4 = arith.constant 0 : index
    %5 = vector.load %arg3[%c0_3, %c0_4] : memref<128x384xbf16, #tpu.memory_space<vmem>>, vector<128x384xbf16>
    tpu.vector_store %arg3[%c0_3, %c0_4], %4 {strides = array<i32>} : memref<128x384xbf16, #tpu.memory_space<vmem>>, vector<128x384xbf16>,
    %6 = vector.extract_strided_slice %2 {offsets = [0, 384], sizes = [128, 128], strides = [1, 1]} : vector<128x512xf32> to vector<128x128xf32>
    %7 = arith.truncf %6 : vector<128x128xf32> to vector<128x128xbf16>
    %c0_5 = arith.constant 0 : index
    %c0_6 = arith.constant 0 : index
    %8 = vector.load %arg4[%c0_5, %c0_6] : memref<128x128xbf16, #tpu.memory_space<vmem>>, vector<128x128xbf16>
    tpu.vector_store %arg4[%c0_5, %c0_6], %7 {strides = array<i32>} : memref<128x128xbf16, #tpu.memory_space<vmem>>, vector<128x128xbf16>,
    %cst_7 = arith.constant dense<0.000000e+00> : vector<512xf32>
    %9 = vector.multi_reduction <add>, %2, %cst_7 [0] : vector<128x512xf32> to vector<512xf32>
    %10 = vector.shape_cast %9 : vector<512xf32> to vector<1x512xf32>
    %11 = vector.shape_cast %10 : vector<1x512xf32> to vector<1x1x512xf32>
    %c0_8 = arith.constant 0 : index
    %c0_9 = arith.constant 0 : index
    %c0_10 = arith.constant 0 : index
    %12 = vector.load %arg5[%c0_8, %c0_9, %c0_10] : memref<1x1x512xf32, #tpu.memory_space<vmem>>, vector<1x1x512xf32>
    tpu.vector_store %arg5[%c0_8, %c0_9, %c0_10], %11 {strides = array<i32>} : memref<1x1x512xf32, #tpu.memory_space<vmem>>, vector<1x1x512xf32>,
    %13 = arith.mulf %2, %2 : vector<128x512xf32>
    %cst_11 = arith.constant dense<0.000000e+00> : vector<512xf32>
    %14 = vector.multi_reduction <add>, %13, %cst_11 [0] : vector<128x512xf32> to vector<512xf32>
    %15 = vector.shape_cast %14 : vector<512xf32> to vector<1x512xf32>
    %16 = vector.shape_cast %15 : vector<1x512xf32> to vector<1x1x512xf32>
    %c0_12 = arith.constant 0 : index
    %c0_13 = arith.constant 0 : index
    %c0_14 = arith.constant 0 : index
    %17 = vector.load %arg6[%c0_12, %c0_13, %c0_14] : memref<1x1x512xf32, #tpu.memory_space<vmem>>, vector<1x1x512xf32>
    tpu.vector_store %arg6[%c0_12, %c0_13, %c0_14], %16 {strides = array<i32>} : memref<1x1x512xf32, #tpu.memory_space<vmem>>, vector<1x1x512xf32>,
    return
  }
  func.func @transform_0(%arg0: i32) -> (i32, i32) {
    %c0_i32 = arith.constant 0 : i32
    %c0_i32_0 = arith.constant 0 : i32
    return %arg0, %c0_i32 : i32, i32
  }
  func.func @transform_1(%arg0: i32) -> (i32, i32) {
    %c0_i32 = arith.constant 0 : i32
    %c0_i32_0 = arith.constant 0 : i32
    %c0_i32_1 = arith.constant 0 : i32
    return %c0_i32, %c0_i32_0 : i32, i32
  }
  func.func @transform_2(%arg0: i32) -> (i32, i32) {
    %c0_i32 = arith.constant 0 : i32
    %c0_i32_0 = arith.constant 0 : i32
    return %arg0, %c0_i32 : i32, i32
  }
  func.func @transform_3(%arg0: i32) -> (i32, i32) {
    %c0_i32 = arith.constant 0 : i32
    %c0_i32_0 = arith.constant 0 : i32
    return %arg0, %c0_i32 : i32, i32
  }
  func.func @transform_4(%arg0: i32) -> (i32, i32, i32) {
    %c0_i32 = arith.constant 0 : i32
    %c0_i32_0 = arith.constant 0 : i32
    %c0_i32_1 = arith.constant 0 : i32
    return %arg0, %c0_i32, %c0_i32_0 : i32, i32, i32
  }
  func.func @transform_5(%arg0: i32) -> (i32, i32, i32) {
    %c0_i32 = arith.constant 0 : i32
    %c0_i32_0 = arith.constant 0 : i32
    %c0_i32_1 = arith.constant 0 : i32
    return %arg0, %c0_i32, %c0_i32_0 : i32, i32, i32
  }
}

</mosaic_0001>

<llo_original>
// kernel: tpu_custom_call.1
$region0: #{tpu_custom_call.1}
  #allocation0 [shape = 'u32[]', space=smem, size = 0x4, offset = 0x4, fixed_abs, tag = 'smem constant byte address 0x4 - core index']
  #allocation1 [shape = 'u32[72,128]{1,0:T(1,128)}', space=vmem, size = 0x9000, scoped, tag = 'internal scratch']
  %s0 = inlined_call_operand.vmem [shape: bf16[256,64], index: 0, kind: input, shape index: {}]
  %s1 = inlined_call_operand.vmem [shape: bf16[64,512], index: 1, kind: input, shape index: {}]
  %s2 = inlined_call_operand.hbm [shape: bf16[256,384], index: 2, kind: output, shape index: {0}]
  %s3 = inlined_call_operand.hbm [shape: bf16[256,128], index: 3, kind: output, shape index: {1}]
  %s4 = inlined_call_operand.hbm [shape: f32[2,1,512], index: 4, kind: output, shape index: {2}]
  %s5 = inlined_call_operand.hbm [shape: f32[2,1,512], index: 5, kind: output, shape index: {3}]
  %6 = xla_tuple %s2, %s3, %s4, %s5
  %s7 = sld [smem:[#allocation0]]
  $region65: #{tpu_custom_call.1} parent=0
    _
  %s9 = ssub.s32 1, %s7
  %s10 = scalar_select 0, %s9, %s7
  $region1: #{tpu_custom_call.1} parent=0
    #allocation2 [shape = 'u8[196608]{0}', space=vmem, size = 0x30000, scoped, tag = 'output window, operand 0']
    #allocation3 [shape = 's32[2]{0}', space=sflag, size = 0x8, scoped, tag = 'scoped memory for tpu_custom_call.1']
    #allocation4 [shape = 'u8[65536]{0}', space=vmem, size = 0x10000, scoped, tag = 'output window, operand 1']
    #allocation5 [shape = 's32[2]{0}', space=sflag, size = 0x8, scoped, tag = 'scoped memory for tpu_custom_call.1']
    #allocation6 [shape = 'u8[4096]{0}', space=vmem, size = 0x1000, scoped, tag = 'output window, operand 2']
    #allocation7 [shape = 'u8[4096]{0}', space=vmem, size = 0x1000, scoped, tag = 'output window, operand 3']
    #allocation8 [shape = 's32[2]{0}', space=sflag, size = 0x8, scoped, tag = 'scoped memory for tpu_custom_call.1']
    %11 = vsyncpa [#allocation3], 0
    %s12 = scalar_lea.sflag [#allocation3], 1
    %13 = vsyncpa %s12, 0
    %14 = vsyncpa [#allocation5], 0
    %s15 = scalar_lea.sflag [#allocation5], 1
    %16 = vsyncpa %s15, 0
    %17 = vsyncpa [#allocation8], 0
    %s18 = scalar_lea.sflag [#allocation8], 1
    %19 = vsyncpa %s18, 0
    loop: start=0, step=1, limit=4
    $region2: #{tpu_custom_call.1} parent=1 // loop_pre_header
      _
    $region3: #{tpu_custom_call.1} parent=1 // loop_header
      %s21 = sphi 0, %s25
      %p22 = scmp.ge.s32.totalorder %s21, 4
      %s31 = sphi 0, %s33
      %s34 = sphi 0, %s31
      %s35 = sphi 0, %s34
      %s51 = sphi 0, %s35
      %s55 = sphi 0, %s55
      %s57 = sphi 0, %s55
      %s58 = sphi 0, %s57
      %s72 = sphi 0, %s58
      %s78 = sphi 0, %s80
      %s81 = sphi 0, %s78
      %s82 = sphi 0, %s81
      %s98 = sphi 0, %s82
      %s104 = sphi 0, %s106
      %s107 = sphi 0, %s104
      %s108 = sphi 0, %s107
      %s124 = sphi 0, %s108
      %s130 = sphi 0, %s132
      %s133 = sphi 0, %s130
      %s134 = sphi 0, %s133
      %s150 = sphi 0, %s134
      %s156 = sphi 0, %s158
      %s159 = sphi 0, %s156
      %s160 = sphi 0, %s159
      %s176 = sphi 0, %s160
    $region4: #{tpu_custom_call.1} parent=1 // loop_header_branch
      %24 = sbr.rel (%p22) target = $region8
    $region5: #{tpu_custom_call.1} parent=1 // loop_body
      %s26 = ssub.s32 %s21, 1
      %s27 = ssub.s32 %s21, 2
      %s28 = sadd.s32 %s21, 1
      %s29 = ssub.s32 %s21, %s28
      %p30 = scmp.eq.s32.totalorder %s29, 0
      %s32 = sadd.s32 %s31, 1
      %s33 = scalar_select %p30, %s31, %s32
      %p36 = pneg %p30
      %p37 = scmp.eq.s32.totalorder %s21, 1
      %p38 = por %p36, %p37
      %p39 = scmp.ne.s32.totalorder %s31, %s34
      %p40 = scmp.eq.s32.totalorder %s21, 0
      %p41 = por %p39, %p40
      %p42 = scmp.ne.s32.totalorder %s31, %s34
      %p43 = scmp.eq.s32.totalorder %s26, 1
      %p44 = por %p42, %p43
      %p45 = scmp.ne.s32.totalorder %s34, %s35
      %p46 = scmp.eq.s32.totalorder %s26, 0
      %p47 = por %p45, %p46
      %p48 = scmp.ne.s32.totalorder %s34, %s35
      %p49 = scmp.eq.s32.totalorder %s27, 1
      %p50 = por %p48, %p49
      %p52 = scmp.ne.s32.totalorder %s35, %s51
      %p53 = scmp.eq.s32.totalorder %s27, 0
      %p54 = por %p52, %p53
      %s56 = sadd.s32 %s55, 1
      %p59 = scmp.eq.s32.totalorder %s21, 1
      %p60 = scmp.ne.s32.totalorder %s55, %s57
      %p61 = scmp.eq.s32.totalorder %s21, 0
      %p62 = por %p60, %p61
      %p63 = scmp.ne.s32.totalorder %s55, %s57
      %p64 = scmp.eq.s32.totalorder %s26, 1
      %p65 = por %p63, %p64
      %p66 = scmp.ne.s32.totalorder %s57, %s58
      %p67 = scmp.eq.s32.totalorder %s26, 0
      %p68 = por %p66, %p67
      %p69 = scmp.ne.s32.totalorder %s57, %s58
      %p70 = scmp.eq.s32.totalorder %s27, 1
      %p71 = por %p69, %p70
      %p73 = scmp.ne.s32.totalorder %s58, %s72
      %p74 = scmp.eq.s32.totalorder %s27, 0
      %p75 = por %p73, %p74
      %s76 = ssub.s32 %s21, %s28
      %p77 = scmp.eq.s32.totalorder %s76, 0
      %s79 = sadd.s32 %s78, 1
      %s80 = scalar_select %p77, %s78, %s79
      %p83 = pneg %p77
      %p84 = scmp.eq.s32.totalorder %s21, 1
      %p85 = por %p83, %p84
      %p86 = scmp.ne.s32.totalorder %s78, %s81
      %p87 = scmp.eq.s32.totalorder %s21, 0
      %p88 = por %p86, %p87
      %p89 = scmp.ne.s32.totalorder %s78, %s81
      %p90 = scmp.eq.s32.totalorder %s26, 1
      %p91 = por %p89, %p90
      %p92 = scmp.ne.s32.totalorder %s81, %s82
      %p93 = scmp.eq.s32.totalorder %s26, 0
      %p94 = por %p92, %p93
      %p95 = scmp.ne.s32.totalorder %s81, %s82
      %p96 = scmp.eq.s32.totalorder %s27, 1
      %p97 = por %p95, %p96
      %p99 = scmp.ne.s32.totalorder %s82, %s98
      %p100 = scmp.eq.s32.totalorder %s27, 0
      %p101 = por %p99, %p100
      %s102 = ssub.s32 %s21, %s28
      %p103 = scmp.eq.s32.totalorder %s102, 0
      %s105 = sadd.s32 %s104, 1
      %s106 = scalar_select %p103, %s104, %s105
      %p109 = pneg %p103
      %p110 = scmp.eq.s32.totalorder %s21, 1
      %p111 = por %p109, %p110
      %p112 = scmp.ne.s32.totalorder %s104, %s107
      %p113 = scmp.eq.s32.totalorder %s21, 0
      %p114 = por %p112, %p113
      %p115 = scmp.ne.s32.totalorder %s104, %s107
      %p116 = scmp.eq.s32.totalorder %s26, 1
      %p117 = por %p115, %p116
      %p118 = scmp.ne.s32.totalorder %s107, %s108
      %p119 = scmp.eq.s32.totalorder %s26, 0
      %p120 = por %p118, %p119
      %p121 = scmp.ne.s32.totalorder %s107, %s108
      %p122 = scmp.eq.s32.totalorder %s27, 1
      %p123 = por %p121, %p122
      %p125 = scmp.ne.s32.totalorder %s108, %s124
      %p126 = scmp.eq.s32.totalorder %s27, 0
      %p127 = por %p125, %p126
      %s128 = ssub.s32 %s21, %s28
      %p129 = scmp.eq.s32.totalorder %s128, 0
      %s131 = sadd.s32 %s130, 1
      %s132 = scalar_select %p129, %s130, %s131
      %p135 = pneg %p129
      %p136 = scmp.eq.s32.totalorder %s21, 1
      %p137 = por %p135, %p136
      %p138 = scmp.ne.s32.totalorder %s130, %s133
      %p139 = scmp.eq.s32.totalorder %s21, 0
      %p140 = por %p138, %p139
      %p141 = scmp.ne.s32.totalorder %s130, %s133
      %p142 = scmp.eq.s32.totalorder %s26, 1
      %p143 = por %p141, %p142
      %p144 = scmp.ne.s32.totalorder %s133, %s134
      %p145 = scmp.eq.s32.totalorder %s26, 0
      %p146 = por %p144, %p145
      %p147 = scmp.ne.s32.totalorder %s133, %s134
      %p148 = scmp.eq.s32.totalorder %s27, 1
      %p149 = por %p147, %p148
      %p151 = scmp.ne.s32.totalorder %s134, %s150
      %p152 = scmp.eq.s32.totalorder %s27, 0
      %p153 = por %p151, %p152
      %s154 = ssub.s32 %s21, %s28
      %p155 = scmp.eq.s32.totalorder %s154, 0
      %s157 = sadd.s32 %s156, 1
      %s158 = scalar_select %p155, %s156, %s157
      %p161 = pneg %p155
      %p162 = scmp.eq.s32.totalorder %s21, 1
      %p163 = por %p161, %p162
      %p164 = scmp.ne.s32.totalorder %s156, %s159
      %p165 = scmp.eq.s32.totalorder %s21, 0
      %p166 = por %p164, %p165
      %p167 = scmp.ne.s32.totalorder %s156, %s159
      %p168 = scmp.eq.s32.totalorder %s26, 1
      %p169 = por %p167, %p168
      %p170 = scmp.ne.s32.totalorder %s159, %s160
      %p171 = scmp.eq.s32.totalorder %s26, 0
      %p172 = por %p170, %p171
      %p173 = scmp.ne.s32.totalorder %s159, %s160
      %p174 = scmp.eq.s32.totalorder %s27, 1
      %p175 = por %p173, %p174
      %p177 = scmp.ne.s32.totalorder %s160, %s176
      %p178 = scmp.eq.s32.totalorder %s27, 0
      %p179 = por %p177, %p178
      %p180 = scmp.le.s32.totalorder 1, %s21
      %p181 = scmp.lt.s32.totalorder %s21, 3
      %p182 = pnand %p180, %p181
      %p183 = pneg %p182
      // Predicated region
      $region9: #{tpu_custom_call.1} parent=5 // pred_check
        _
      $region10: #{tpu_custom_call.1} parent=5 // pred_check_branch
        %185 = sbr.rel (%p182) target = $region12
      $region11: #{tpu_custom_call.1} parent=5 // pred_region
        %s186 = ssub.s32 %s21, 1
        // Predicated region
        $region13: #{tpu_custom_call.1} parent=11 // pred_check
          %p187 = pneg %p68
        $region14: #{tpu_custom_call.1} parent=11 // pred_check_branch
          %189 = sbr.rel (%p187) target = $region16
        $region15: #{tpu_custom_call.1} parent=11 // pred_region
          _
        $region16: #{tpu_custom_call.1} parent=11 // pred_fallthru
          _
      $region12: #{tpu_custom_call.1} parent=5 // pred_fallthru
        _
      %p190 = scmp.lt.s32.totalorder %s21, 2
      // Predicated region
      $region17: #{tpu_custom_call.1} parent=5 // pred_check
        %p191 = pneg %p190
      $region18: #{tpu_custom_call.1} parent=5 // pred_check_branch
        %193 = sbr.rel (%p191) target = $region20
      $region19: #{tpu_custom_call.1} parent=5 // pred_region
        // Predicated region
        $region21: #{tpu_custom_call.1} parent=19 // pred_check
          %p194 = pneg %p41
        $region22: #{tpu_custom_call.1} parent=19 // pred_check_branch
          %196 = sbr.rel (%p194) target = $region24
        $region23: #{tpu_custom_call.1} parent=19 // pred_region
          %s197 = smul.u32 16, %s21
          %p198 = scmp.lt.s32.totalorder %s197, 31
          %s199 = scalar_select %p198, %s197, 31
          %s200 = smul.addr %s199, 4
          %s201 = scalar_lea.vmem %s0, %s200
          %s202 = smul.u32 16, %s21
        $region24: #{tpu_custom_call.1} parent=19 // pred_fallthru
          _
      $region20: #{tpu_custom_call.1} parent=5 // pred_fallthru
        _
      %p203 = scmp.le.s32.totalorder 1, %s21
      %p204 = scmp.lt.s32.totalorder %s21, 3
      %p205 = pnand %p203, %p204
      %p206 = pneg %p205
      // Predicated region
      $region25: #{tpu_custom_call.1} parent=5 // pred_check
        _
      $region26: #{tpu_custom_call.1} parent=5 // pred_check_branch
        %208 = sbr.rel (%p205) target = $region28
      $region27: #{tpu_custom_call.1} parent=5 // pred_region
        %s209 = ssub.s32 %s21, 1
        %s210 = smul.u32 16, %s26
        %p211 = scmp.lt.s32.totalorder %s210, 31
        %s212 = scalar_select %p211, %s210, 31
        %s213 = smul.addr %s212, 4
        %s214 = scalar_lea.vmem %s0, %s213
        %p215 = pneg %p47
        %p216 = pneg %p44
        %p217 = pneg %p68
        %p218 = pneg %p65
        %p219 = pneg %p94
        %p220 = pneg %p91
        %s221 = sand.u32 %s81, 1
        %s222 = scalar_lea.sflag [#allocation3], %s221
        %s223 = sand.u32 %s81, 1
        %s224 = smul.addr %s223, 192
        %s225 = scalar_lea.vmem [#allocation2], %s224
        %p226 = pneg %p120
        %p227 = pneg %p117
        %s228 = sand.u32 %s26, 1
        %s229 = scalar_lea.sflag [#allocation5], %s228
        %s230 = sand.u32 %s107, 1
        %s231 = smul.addr %s230, 64
        %s232 = scalar_lea.vmem [#allocation4], %s231
        %p233 = pneg %p146
        %p234 = pneg %p143
        %s235 = sand.u32 %s26, 1
        %s236 = scalar_lea.sflag [#allocation5], %s235
        %s237 = sand.u32 %s133, 1
        %s238 = smul.addr %s237, 4
        %s239 = scalar_lea.vmem [#allocation6], %s238
        %p240 = pneg %p172
        %p241 = pneg %p169
        %s242 = sand.u32 %s159, 1
        %s243 = scalar_lea.sflag [#allocation8], %s242
        %s244 = sand.u32 %s159, 1
        %s245 = smul.addr %s244, 4
        %s246 = scalar_lea.vmem [#allocation7], %s245
        %s247 = smul.u32 16, %s26
        %p248 = scmp.lt.s32.totalorder %s247, 31
        %s249 = scalar_select %p248, %s247, 31
        %s250 = smul.addr %s249, 4
        %s251 = scalar_lea.vmem %s0, %s250
        %s252 = smul.u32 16, %s26
        %s253 = smul.u32 16, %s26
        %s254 = smul.u32 16, %s26
        %v256 = vld [vmem:[%s251] sm:$0xf]
        %v257 = vld [vmem:[%s251 + $0x4] sm:$0xf]
        %v258 = vld [vmem:[%s251 + $0x8] sm:$0xf]
        %v259 = vld [vmem:[%s251 + $0xc] sm:$0xf]
        %v260 = vld [vmem:[%s251 + $0x10] sm:$0xf]
        %v261 = vld [vmem:[%s251 + $0x14] sm:$0xf]
        %v262 = vld [vmem:[%s251 + $0x18] sm:$0xf]
        %v263 = vld [vmem:[%s251 + $0x1c] sm:$0xf]
        %v264 = vld [vmem:[%s251 + $0x20] sm:$0xf]
        %v265 = vld [vmem:[%s251 + $0x24] sm:$0xf]
        %v266 = vld [vmem:[%s251 + $0x28] sm:$0xf]
        %v267 = vld [vmem:[%s251 + $0x2c] sm:$0xf]
        %v268 = vld [vmem:[%s251 + $0x30] sm:$0xf]
        %v269 = vld [vmem:[%s251 + $0x34] sm:$0xf]
        %v270 = vld [vmem:[%s251 + $0x38] sm:$0xf]
        %v271 = vld [vmem:[%s251 + $0x3c] sm:$0xf]
        %v272 = vld [vmem:[%s1] sm:$0xff]
        %v273 = vld [vmem:[%s1 + $0x8] sm:$0xff]
        %v274 = vld [vmem:[%s1 + $0x10] sm:$0xff]
        %v275 = vld [vmem:[%s1 + $0x18] sm:$0xff]
        %v276 = vld [vmem:[%s1 + $0x20] sm:$0xff]
        %v277 = vld [vmem:[%s1 + $0x28] sm:$0xff]
        %v278 = vld [vmem:[%s1 + $0x30] sm:$0xff]
        %v279 = vld [vmem:[%s1 + $0x38] sm:$0xff]
        %v280 = vld [vmem:[%s1 + $0x40] sm:$0xff]
        %v281 = vld [vmem:[%s1 + $0x48] sm:$0xff]
        %v282 = vld [vmem:[%s1 + $0x50] sm:$0xff]
        %v283 = vld [vmem:[%s1 + $0x58] sm:$0xff]
        %v284 = vld [vmem:[%s1 + $0x60] sm:$0xff]
        %v285 = vld [vmem:[%s1 + $0x68] sm:$0xff]
        %v286 = vld [vmem:[%s1 + $0x70] sm:$0xff]
        %v287 = vld [vmem:[%s1 + $0x78] sm:$0xff]
        %v304 = vunpack.c.l.b16 %v256
        %v305 = vunpack.c.l.b16 %v257
        %v306 = vunpack.c.l.b16 %v258
        %v307 = vunpack.c.l.b16 %v259
        %v308 = vunpack.c.l.b16 %v260
        %v309 = vunpack.c.l.b16 %v261
        %v310 = vunpack.c.l.b16 %v262
        %v311 = vunpack.c.l.b16 %v263
        %v312 = vunpack.c.l.b16 %v264
        %v313 = vunpack.c.l.b16 %v265
        %v314 = vunpack.c.l.b16 %v266
        %v315 = vunpack.c.l.b16 %v267
        %v316 = vunpack.c.l.b16 %v268
        %v317 = vunpack.c.l.b16 %v269
        %v318 = vunpack.c.l.b16 %v270
        %v319 = vunpack.c.l.b16 %v271
        %v320 = vpack.c.b16 %v305, %v304
        %v321 = vpack.c.b16 %v307, %v306
        %v322 = vpack.c.b16 %v309, %v308
        %v323 = vpack.c.b16 %v311, %v310
        %v324 = vpack.c.b16 %v313, %v312
        %v325 = vpack.c.b16 %v315, %v314
        %v326 = vpack.c.b16 %v317, %v316
        %v327 = vpack.c.b16 %v319, %v318
        %v344 = vunpack.c.l.b16 %v272
        %v345 = vunpack.c.h.b16 %v272
        %v346 = vunpack.c.l.b16 %v273
        %v347 = vunpack.c.h.b16 %v273
        %v348 = vunpack.c.l.b16 %v274
        %v349 = vunpack.c.h.b16 %v274
        %v350 = vunpack.c.l.b16 %v275
        %v351 = vunpack.c.h.b16 %v275
        %v352 = vunpack.c.l.b16 %v276
        %v353 = vunpack.c.h.b16 %v276
        %v354 = vunpack.c.l.b16 %v277
        %v355 = vunpack.c.h.b16 %v277
        %v356 = vunpack.c.l.b16 %v278
        %v357 = vunpack.c.h.b16 %v278
        %v358 = vunpack.c.l.b16 %v279
        %v359 = vunpack.c.h.b16 %v279
        %v360 = vunpack.c.l.b16 %v280
        %v361 = vunpack.c.h.b16 %v280
        %v362 = vunpack.c.l.b16 %v281
        %v363 = vunpack.c.h.b16 %v281
        %v364 = vunpack.c.l.b16 %v282
        %v365 = vunpack.c.h.b16 %v282
        %v366 = vunpack.c.l.b16 %v283
        %v367 = vunpack.c.h.b16 %v283
        %v368 = vunpack.c.l.b16 %v284
        %v369 = vunpack.c.h.b16 %v284
        %v370 = vunpack.c.l.b16 %v285
        %v371 = vunpack.c.h.b16 %v285
        %v372 = vunpack.c.l.b16 %v286
        %v373 = vunpack.c.h.b16 %v286
        %v374 = vunpack.c.l.b16 %v287
        %v375 = vunpack.c.h.b16 %v287
        %v376 = vpack.c.b16 %v348, %v344
        %v377 = vpack.c.b16 %v349, %v345
        %v378 = vpack.c.b16 %v350, %v346
        %v379 = vpack.c.b16 %v351, %v347
        %v380 = vpack.c.b16 %v356, %v352
        %v381 = vpack.c.b16 %v357, %v353
        %v382 = vpack.c.b16 %v358, %v354
        %v383 = vpack.c.b16 %v359, %v355
        %v384 = vpack.c.b16 %v364, %v360
        %v385 = vpack.c.b16 %v365, %v361
        %v386 = vpack.c.b16 %v366, %v362
        %v387 = vpack.c.b16 %v367, %v363
        %v388 = vpack.c.b16 %v372, %v368
        %v389 = vpack.c.b16 %v373, %v369
        %v390 = vpack.c.b16 %v374, %v370
        %v391 = vpack.c.b16 %v375, %v371
        %vm408 = vcmask 523264
        %v410 = vsel %vm408, %v320, 0
        %v413 = vsel %vm408, %v321, 0
        %v416 = vsel %vm408, %v322, 0
        %v419 = vsel %vm408, %v323, 0
        %v422 = vsel %vm408, %v324, 0
        %v425 = vsel %vm408, %v325, 0
        %v428 = vsel %vm408, %v326, 0
        %v431 = vsel %vm408, %v327, 0
        %433 = vmatpush.bf16.msra.mxu0 0
        %434 = vmatpush.bf16.msra.mxu0 0
        %435 = vmatpush.bf16.msra.mxu0 0
        %436 = vmatpush.bf16.msra.mxu0 0
        %437 = vmatpush.bf16.msra.mxu0 %v388
        %438 = vmatpush.bf16.msra.mxu0 %v384
        %439 = vmatpush.bf16.msra.mxu0 %v380
        %440 = vmatpush.bf16.msra.mxu0 %v376
        %441 = vmatmul.bf16.gmra.mxu0 %v410
        %v442 = vpop.f32.mrf.mxu0
        %v443 = vadd.f32 0.0, %v442
        %v444 = vpop.f32.mrf.mxu0
        %v445 = vadd.f32 0.0, %v444
        %446 = vmatmul.bf16.gmra.mxu0 %v413
        %v447 = vpop.f32.mrf.mxu0
        %v448 = vadd.f32 0.0, %v447
        %v449 = vpop.f32.mrf.mxu0
        %v450 = vadd.f32 0.0, %v449
        %451 = vmatmul.bf16.gmra.mxu0 %v416
        %v452 = vpop.f32.mrf.mxu0
        %v453 = vadd.f32 0.0, %v452
        %v454 = vpop.f32.mrf.mxu0
        %v455 = vadd.f32 0.0, %v454
        %456 = vmatmul.bf16.gmra.mxu0 %v419
        %v457 = vpop.f32.mrf.mxu0
        %v458 = vadd.f32 0.0, %v457
        %v459 = vpop.f32.mrf.mxu0
        %v460 = vadd.f32 0.0, %v459
        %461 = vmatmul.bf16.gmra.mxu0 %v422
        %v462 = vpop.f32.mrf.mxu0
        %v463 = vadd.f32 0.0, %v462
        %v464 = vpop.f32.mrf.mxu0
        %v465 = vadd.f32 0.0, %v464
        %466 = vmatmul.bf16.gmra.mxu0 %v425
        %v467 = vpop.f32.mrf.mxu0
        %v468 = vadd.f32 0.0, %v467
        %v469 = vpop.f32.mrf.mxu0
        %v470 = vadd.f32 0.0, %v469
        %471 = vmatmul.bf16.gmra.mxu0 %v428
        %v472 = vpop.f32.mrf.mxu0
        %v473 = vadd.f32 0.0, %v472
        %v474 = vpop.f32.mrf.mxu0
        %v475 = vadd.f32 0.0, %v474
        %476 = vmatmul.bf16.gmra.mxu0 %v431
        %v477 = vpop.f32.mrf.mxu0
        %v478 = vadd.f32 0.0, %v477
        %v479 = vpop.f32.mrf.mxu0
        %v480 = vadd.f32 0.0, %v479
        %481 = vdwg.mxu0
        %482 = vmatpush.bf16.msra.mxu0 0
        %483 = vmatpush.bf16.msra.mxu0 0
        %484 = vmatpush.bf16.msra.mxu0 0
        %485 = vmatpush.bf16.msra.mxu0 0
        %486 = vmatpush.bf16.msra.mxu0 %v389
        %487 = vmatpush.bf16.msra.mxu0 %v385
        %488 = vmatpush.bf16.msra.mxu0 %v381
        %489 = vmatpush.bf16.msra.mxu0 %v377
        %490 = vmatmul.bf16.gmra.mxu0 %v410
        %v491 = vpop.f32.mrf.mxu0
        %v492 = vadd.f32 0.0, %v491
        %v493 = vpop.f32.mrf.mxu0
        %v494 = vadd.f32 0.0, %v493
        %495 = vmatmul.bf16.gmra.mxu0 %v413
        %v496 = vpop.f32.mrf.mxu0
        %v497 = vadd.f32 0.0, %v496
        %v498 = vpop.f32.mrf.mxu0
        %v499 = vadd.f32 0.0, %v498
        %500 = vmatmul.bf16.gmra.mxu0 %v416
        %v501 = vpop.f32.mrf.mxu0
        %v502 = vadd.f32 0.0, %v501
        %v503 = vpop.f32.mrf.mxu0
        %v504 = vadd.f32 0.0, %v503
        %505 = vmatmul.bf16.gmra.mxu0 %v419
        %v506 = vpop.f32.mrf.mxu0
        %v507 = vadd.f32 0.0, %v506
        %v508 = vpop.f32.mrf.mxu0
        %v509 = vadd.f32 0.0, %v508
        %510 = vmatmul.bf16.gmra.mxu0 %v422
        %v511 = vpop.f32.mrf.mxu0
        %v512 = vadd.f32 0.0, %v511
        %v513 = vpop.f32.mrf.mxu0
        %v514 = vadd.f32 0.0, %v513
        %515 = vmatmul.bf16.gmra.mxu0 %v425
        %v516 = vpop.f32.mrf.mxu0
        %v517 = vadd.f32 0.0, %v516
        %v518 = vpop.f32.mrf.mxu0
        %v519 = vadd.f32 0.0, %v518
        %520 = vmatmul.bf16.gmra.mxu0 %v428
        %v521 = vpop.f32.mrf.mxu0
        %v522 = vadd.f32 0.0, %v521
        %v523 = vpop.f32.mrf.mxu0
        %v524 = vadd.f32 0.0, %v523
        %525 = vmatmul.bf16.gmra.mxu0 %v431
        %v526 = vpop.f32.mrf.mxu0
        %v527 = vadd.f32 0.0, %v526
        %v528 = vpop.f32.mrf.mxu0
        %v529 = vadd.f32 0.0, %v528
        %530 = vdwg.mxu0
        %531 = vmatpush.bf16.msra.mxu0 0
        %532 = vmatpush.bf16.msra.mxu0 0
        %533 = vmatpush.bf16.msra.mxu0 0
        %534 = vmatpush.bf16.msra.mxu0 0
        %535 = vmatpush.bf16.msra.mxu0 %v390
        %536 = vmatpush.bf16.msra.mxu0 %v386
        %537 = vmatpush.bf16.msra.mxu0 %v382
        %538 = vmatpush.bf16.msra.mxu0 %v378
        %539 = vmatmul.bf16.gmra.mxu0 %v410
        %v540 = vpop.f32.mrf.mxu0
        %v541 = vadd.f32 0.0, %v540
        %v542 = vpop.f32.mrf.mxu0
        %v543 = vadd.f32 0.0, %v542
        %544 = vmatmul.bf16.gmra.mxu0 %v413
        %v545 = vpop.f32.mrf.mxu0
        %v546 = vadd.f32 0.0, %v545
        %v547 = vpop.f32.mrf.mxu0
        %v548 = vadd.f32 0.0, %v547
        %549 = vmatmul.bf16.gmra.mxu0 %v416
        %v550 = vpop.f32.mrf.mxu0
        %v551 = vadd.f32 0.0, %v550
        %v552 = vpop.f32.mrf.mxu0
        %v553 = vadd.f32 0.0, %v552
        %554 = vmatmul.bf16.gmra.mxu0 %v419
        %v555 = vpop.f32.mrf.mxu0
        %v556 = vadd.f32 0.0, %v555
        %v557 = vpop.f32.mrf.mxu0
        %v558 = vadd.f32 0.0, %v557
        %559 = vmatmul.bf16.gmra.mxu0 %v422
        %v560 = vpop.f32.mrf.mxu0
        %v561 = vadd.f32 0.0, %v560
        %v562 = vpop.f32.mrf.mxu0
        %v563 = vadd.f32 0.0, %v562
        %564 = vmatmul.bf16.gmra.mxu0 %v425
        %v565 = vpop.f32.mrf.mxu0
        %v566 = vadd.f32 0.0, %v565
        %v567 = vpop.f32.mrf.mxu0
        %v568 = vadd.f32 0.0, %v567
        %569 = vmatmul.bf16.gmra.mxu0 %v428
        %v570 = vpop.f32.mrf.mxu0
        %v571 = vadd.f32 0.0, %v570
        %v572 = vpop.f32.mrf.mxu0
        %v573 = vadd.f32 0.0, %v572
        %574 = vmatmul.bf16.gmra.mxu0 %v431
        %v575 = vpop.f32.mrf.mxu0
        %v576 = vadd.f32 0.0, %v575
        %v577 = vpop.f32.mrf.mxu0
        %v578 = vadd.f32 0.0, %v577
        %579 = vdwg.mxu0
        %580 = vmatpush.bf16.msra.mxu0 0
        %581 = vmatpush.bf16.msra.mxu0 0
        %582 = vmatpush.bf16.msra.mxu0 0
        %583 = vmatpush.bf16.msra.mxu0 0
        %584 = vmatpush.bf16.msra.mxu0 %v391
        %585 = vmatpush.bf16.msra.mxu0 %v387
        %586 = vmatpush.bf16.msra.mxu0 %v383
        %587 = vmatpush.bf16.msra.mxu0 %v379
        %588 = vmatmul.bf16.gmra.mxu0 %v410
        %v589 = vpop.f32.mrf.mxu0
        %v590 = vadd.f32 0.0, %v589
        %v591 = vpop.f32.mrf.mxu0
        %v592 = vadd.f32 0.0, %v591
        %593 = vmatmul.bf16.gmra.mxu0 %v413
        %v594 = vpop.f32.mrf.mxu0
        %v595 = vadd.f32 0.0, %v594
        %v596 = vpop.f32.mrf.mxu0
        %v597 = vadd.f32 0.0, %v596
        %598 = vmatmul.bf16.gmra.mxu0 %v416
        %v599 = vpop.f32.mrf.mxu0
        %v600 = vadd.f32 0.0, %v599
        %v601 = vpop.f32.mrf.mxu0
        %v602 = vadd.f32 0.0, %v601
        %603 = vmatmul.bf16.gmra.mxu0 %v419
        %v604 = vpop.f32.mrf.mxu0
        %v605 = vadd.f32 0.0, %v604
        %v606 = vpop.f32.mrf.mxu0
        %v607 = vadd.f32 0.0, %v606
        %608 = vmatmul.bf16.gmra.mxu0 %v422
        %v609 = vpop.f32.mrf.mxu0
        %v610 = vadd.f32 0.0, %v609
        %v611 = vpop.f32.mrf.mxu0
        %v612 = vadd.f32 0.0, %v611
        %613 = vmatmul.bf16.gmra.mxu0 %v425
        %v614 = vpop.f32.mrf.mxu0
        %v615 = vadd.f32 0.0, %v614
        %v616 = vpop.f32.mrf.mxu0
        %v617 = vadd.f32 0.0, %v616
        %618 = vmatmul.bf16.gmra.mxu0 %v428
        %v619 = vpop.f32.mrf.mxu0
        %v620 = vadd.f32 0.0, %v619
        %v621 = vpop.f32.mrf.mxu0
        %v622 = vadd.f32 0.0, %v621
        %623 = vmatmul.bf16.gmra.mxu0 %v431
        %v624 = vpop.f32.mrf.mxu0
        %v625 = vadd.f32 0.0, %v624
        %v626 = vpop.f32.mrf.mxu0
        %v627 = vadd.f32 0.0, %v626
        %628 = vdwg.mxu0
        %v629 = vpack.c.bf16 %v492, %v443
        %v630 = vpack.c.bf16 %v541, %v541
        %v631 = vpack.c.bf16 %v494, %v445
        %v632 = vpack.c.bf16 %v543, %v543
        %v633 = vpack.c.bf16 %v497, %v448
        %v634 = vpack.c.bf16 %v546, %v546
        %v635 = vpack.c.bf16 %v499, %v450
        %v636 = vpack.c.bf16 %v548, %v548
        %v637 = vpack.c.bf16 %v502, %v453
        %v638 = vpack.c.bf16 %v551, %v551
        %v639 = vpack.c.bf16 %v504, %v455
        %v640 = vpack.c.bf16 %v553, %v553
        %v641 = vpack.c.bf16 %v507, %v458
        %v642 = vpack.c.bf16 %v556, %v556
        %v643 = vpack.c.bf16 %v509, %v460
        %v644 = vpack.c.bf16 %v558, %v558
        %v645 = vpack.c.bf16 %v512, %v463
        %v646 = vpack.c.bf16 %v561, %v561
        %v647 = vpack.c.bf16 %v514, %v465
        %v648 = vpack.c.bf16 %v563, %v563
        %v649 = vpack.c.bf16 %v517, %v468
        %v650 = vpack.c.bf16 %v566, %v566
        %v651 = vpack.c.bf16 %v519, %v470
        %v652 = vpack.c.bf16 %v568, %v568
        %v653 = vpack.c.bf16 %v522, %v473
        %v654 = vpack.c.bf16 %v571, %v571
        %v655 = vpack.c.bf16 %v524, %v475
        %v656 = vpack.c.bf16 %v573, %v573
        %v657 = vpack.c.bf16 %v527, %v478
        %v658 = vpack.c.bf16 %v576, %v576
        %v659 = vpack.c.bf16 %v529, %v480
        %v660 = vpack.c.bf16 %v578, %v578
        %661 = vst [vmem:[%s225] sm:$0xff] %v629
        %662 = vst [vmem:[%s225 + $0x8] sm:$0xf] %v630
        %663 = vst [vmem:[%s225 + $0xc] sm:$0xff] %v631
        %664 = vst [vmem:[%s225 + $0x14] sm:$0xf] %v632
        %665 = vst [vmem:[%s225 + $0x18] sm:$0xff] %v633
        %666 = vst [vmem:[%s225 + $0x20] sm:$0xf] %v634
        %667 = vst [vmem:[%s225 + $0x24] sm:$0xff] %v635
        %668 = vst [vmem:[%s225 + $0x2c] sm:$0xf] %v636
        %669 = vst [vmem:[%s225 + $0x30] sm:$0xff] %v637
        %670 = vst [vmem:[%s225 + $0x38] sm:$0xf] %v638
        %671 = vst [vmem:[%s225 + $0x3c] sm:$0xff] %v639
        %672 = vst [vmem:[%s225 + $0x44] sm:$0xf] %v640
        %673 = vst [vmem:[%s225 + $0x48] sm:$0xff] %v641
        %674 = vst [vmem:[%s225 + $0x50] sm:$0xf] %v642
        %675 = vst [vmem:[%s225 + $0x54] sm:$0xff] %v643
        %676 = vst [vmem:[%s225 + $0x5c] sm:$0xf] %v644
        %677 = vst [vmem:[%s225 + $0x60] sm:$0xff] %v645
        %678 = vst [vmem:[%s225 + $0x68] sm:$0xf] %v646
        %679 = vst [vmem:[%s225 + $0x6c] sm:$0xff] %v647
        %680 = vst [vmem:[%s225 + $0x74] sm:$0xf] %v648
        %681 = vst [vmem:[%s225 + $0x78] sm:$0xff] %v649
        %682 = vst [vmem:[%s225 + $0x80] sm:$0xf] %v650
        %683 = vst [vmem:[%s225 + $0x84] sm:$0xff] %v651
        %684 = vst [vmem:[%s225 + $0x8c] sm:$0xf] %v652
        %685 = vst [vmem:[%s225 + $0x90] sm:$0xff] %v653
        %686 = vst [vmem:[%s225 + $0x98] sm:$0xf] %v654
        %687 = vst [vmem:[%s225 + $0x9c] sm:$0xff] %v655
        %688 = vst [vmem:[%s225 + $0xa4] sm:$0xf] %v656
        %689 = vst [vmem:[%s225 + $0xa8] sm:$0xff] %v657
        %690 = vst [vmem:[%s225 + $0xb0] sm:$0xf] %v658
        %691 = vst [vmem:[%s225 + $0xb4] sm:$0xff] %v659
        %692 = vst [vmem:[%s225 + $0xbc] sm:$0xf] %v660
        %v693 = vpack.c.bf16 %v590, %v590
        %v694 = vpack.c.bf16 %v592, %v592
        %v695 = vpack.c.bf16 %v595, %v595
        %v696 = vpack.c.bf16 %v597, %v597
        %v697 = vpack.c.bf16 %v600, %v600
        %v698 = vpack.c.bf16 %v602, %v602
        %v699 = vpack.c.bf16 %v605, %v605
        %v700 = vpack.c.bf16 %v607, %v607
        %v701 = vpack.c.bf16 %v610, %v610
        %v702 = vpack.c.bf16 %v612, %v612
        %v703 = vpack.c.bf16 %v615, %v615
        %v704 = vpack.c.bf16 %v617, %v617
        %v705 = vpack.c.bf16 %v620, %v620
        %v706 = vpack.c.bf16 %v622, %v622
        %v707 = vpack.c.bf16 %v625, %v625
        %v708 = vpack.c.bf16 %v627, %v627
        %709 = vst [vmem:[%s232] sm:$0xf] %v693
        %710 = vst [vmem:[%s232 + $0x4] sm:$0xf] %v694
        %711 = vst [vmem:[%s232 + $0x8] sm:$0xf] %v695
        %712 = vst [vmem:[%s232 + $0xc] sm:$0xf] %v696
        %713 = vst [vmem:[%s232 + $0x10] sm:$0xf] %v697
        %714 = vst [vmem:[%s232 + $0x14] sm:$0xf] %v698
        %715 = vst [vmem:[%s232 + $0x18] sm:$0xf] %v699
        %716 = vst [vmem:[%s232 + $0x1c] sm:$0xf] %v700
        %717 = vst [vmem:[%s232 + $0x20] sm:$0xf] %v701
        %718 = vst [vmem:[%s232 + $0x24] sm:$0xf] %v702
        %719 = vst [vmem:[%s232 + $0x28] sm:$0xf] %v703
        %720 = vst [vmem:[%s232 + $0x2c] sm:$0xf] %v704
        %721 = vst [vmem:[%s232 + $0x30] sm:$0xf] %v705
        %722 = vst [vmem:[%s232 + $0x34] sm:$0xf] %v706
        %723 = vst [vmem:[%s232 + $0x38] sm:$0xf] %v707
        %724 = vst [vmem:[%s232 + $0x3c] sm:$0xf] %v708
        %v725 = vadd.f32 %v443, %v445
        %v726 = vadd.f32 %v725, %v448
        %v727 = vadd.f32 %v726, %v450
        %v728 = vadd.f32 %v727, %v453
        %v729 = vadd.f32 %v728, %v455
        %v730 = vadd.f32 %v729, %v458
        %v731 = vadd.f32 %v730, %v460
        %v732 = vadd.f32 %v731, %v463
        %v733 = vadd.f32 %v732, %v465
        %v734 = vadd.f32 %v733, %v468
        %v735 = vadd.f32 %v734, %v470
        %v736 = vadd.f32 %v735, %v473
        %v737 = vadd.f32 %v736, %v475
        %v738 = vadd.f32 %v737, %v478
        %v739 = vadd.f32 %v738, %v480
        %v740 = vrot.slane %v739, 4
        %v741 = vadd.f32 %v739, %v740
        %v742 = vrot.slane %v741, 2
        %v743 = vadd.f32 %v741, %v742
        %v744 = vrot.slane %v743, 1
        %v745 = vadd.f32 %v743, %v744
        %v746 = vadd.f32 %v492, %v494
        %v747 = vadd.f32 %v746, %v497
        %v748 = vadd.f32 %v747, %v499
        %v749 = vadd.f32 %v748, %v502
        %v750 = vadd.f32 %v749, %v504
        %v751 = vadd.f32 %v750, %v507
        %v752 = vadd.f32 %v751, %v509
        %v753 = vadd.f32 %v752, %v512
        %v754 = vadd.f32 %v753, %v514
        %v755 = vadd.f32 %v754, %v517
        %v756 = vadd.f32 %v755, %v519
        %v757 = vadd.f32 %v756, %v522
        %v758 = vadd.f32 %v757, %v524
        %v759 = vadd.f32 %v758, %v527
        %v760 = vadd.f32 %v759, %v529
        %v761 = vrot.slane %v760, 4
        %v762 = vadd.f32 %v760, %v761
        %v763 = vrot.slane %v762, 2
        %v764 = vadd.f32 %v762, %v763
        %v765 = vrot.slane %v764, 1
        %v766 = vadd.f32 %v764, %v765
        %v767 = vadd.f32 %v541, %v543
        %v768 = vadd.f32 %v767, %v546
        %v769 = vadd.f32 %v768, %v548
        %v770 = vadd.f32 %v769, %v551
        %v771 = vadd.f32 %v770, %v553
        %v772 = vadd.f32 %v771, %v556
        %v773 = vadd.f32 %v772, %v558
        %v774 = vadd.f32 %v773, %v561
        %v775 = vadd.f32 %v774, %v563
        %v776 = vadd.f32 %v775, %v566
        %v777 = vadd.f32 %v776, %v568
        %v778 = vadd.f32 %v777, %v571
        %v779 = vadd.f32 %v778, %v573
        %v780 = vadd.f32 %v779, %v576
        %v781 = vadd.f32 %v780, %v578
        %v782 = vrot.slane %v781, 4
        %v783 = vadd.f32 %v781, %v782
        %v784 = vrot.slane %v783, 2
        %v785 = vadd.f32 %v783, %v784
        %v786 = vrot.slane %v785, 1
        %v787 = vadd.f32 %v785, %v786
        %v788 = vadd.f32 %v590, %v592
        %v789 = vadd.f32 %v788, %v595
        %v790 = vadd.f32 %v789, %v597
        %v791 = vadd.f32 %v790, %v600
        %v792 = vadd.f32 %v791, %v602
        %v793 = vadd.f32 %v792, %v605
        %v794 = vadd.f32 %v793, %v607
        %v795 = vadd.f32 %v794, %v610
        %v796 = vadd.f32 %v795, %v612
        %v797 = vadd.f32 %v796, %v615
        %v798 = vadd.f32 %v797, %v617
        %v799 = vadd.f32 %v798, %v620
        %v800 = vadd.f32 %v799, %v622
        %v801 = vadd.f32 %v800, %v625
        %v802 = vadd.f32 %v801, %v627
        %v803 = vrot.slane %v802, 4
        %v804 = vadd.f32 %v802, %v803
        %v805 = vrot.slane %v804, 2
        %v806 = vadd.f32 %v804, %v805
        %v807 = vrot.slane %v806, 1
        %v808 = vadd.f32 %v806, %v807
        %v813 = vrot.slane %v766, 7
        %v814 = vrot.slane %v787, 6
        %v815 = vrot.slane %v808, 5
        %vm816 = vcmask 1040384
        %v817 = vsel %vm816, %v745, %v813
        %vm818 = vcmask 1042434
        %v819 = vsel %vm818, %v814, %v815
        %vm820 = vcmask 1041408
        %v821 = vsel %vm820, %v817, %v819
        %v823 = vlaneseq
        %vm824 = vcmp.ge.s32.totalorder %v823, 0
        %vm825 = vcmp.lt.s32.totalorder %v823, 512
        %vm826 = vmand %vm824, %vm825
        %827 = vst.msk [vmem:[%s239] sm:$0xf] %vm826, %v821
        %v828 = vmul.f32 %v443, %v443
        %v829 = vmul.f32 %v492, %v492
        %v830 = vmul.f32 %v541, %v541
        %v831 = vmul.f32 %v590, %v590
        %v832 = vmul.f32 %v445, %v445
        %v833 = vmul.f32 %v494, %v494
        %v834 = vmul.f32 %v543, %v543
        %v835 = vmul.f32 %v592, %v592
        %v836 = vmul.f32 %v448, %v448
        %v837 = vmul.f32 %v497, %v497
        %v838 = vmul.f32 %v546, %v546
        %v839 = vmul.f32 %v595, %v595
        %v840 = vmul.f32 %v450, %v450
        %v841 = vmul.f32 %v499, %v499
        %v842 = vmul.f32 %v548, %v548
        %v843 = vmul.f32 %v597, %v597
        %v844 = vmul.f32 %v453, %v453
        %v845 = vmul.f32 %v502, %v502
        %v846 = vmul.f32 %v551, %v551
        %v847 = vmul.f32 %v600, %v600
        %v848 = vmul.f32 %v455, %v455
        %v849 = vmul.f32 %v504, %v504
        %v850 = vmul.f32 %v553, %v553
        %v851 = vmul.f32 %v602, %v602
        %v852 = vmul.f32 %v458, %v458
        %v853 = vmul.f32 %v507, %v507
        %v854 = vmul.f32 %v556, %v556
        %v855 = vmul.f32 %v605, %v605
        %v856 = vmul.f32 %v460, %v460
        %v857 = vmul.f32 %v509, %v509
        %v858 = vmul.f32 %v558, %v558
        %v859 = vmul.f32 %v607, %v607
        %v860 = vmul.f32 %v463, %v463
        %v861 = vmul.f32 %v512, %v512
        %v862 = vmul.f32 %v561, %v561
        %v863 = vmul.f32 %v610, %v610
        %v864 = vmul.f32 %v465, %v465
        %v865 = vmul.f32 %v514, %v514
        %v866 = vmul.f32 %v563, %v563
        %v867 = vmul.f32 %v612, %v612
        %v868 = vmul.f32 %v468, %v468
        %v869 = vmul.f32 %v517, %v517
        %v870 = vmul.f32 %v566, %v566
        %v871 = vmul.f32 %v615, %v615
        %v872 = vmul.f32 %v470, %v470
        %v873 = vmul.f32 %v519, %v519
        %v874 = vmul.f32 %v568, %v568
        %v875 = vmul.f32 %v617, %v617
        %v876 = vmul.f32 %v473, %v473
        %v877 = vmul.f32 %v522, %v522
        %v878 = vmul.f32 %v571, %v571
        %v879 = vmul.f32 %v620, %v620
        %v880 = vmul.f32 %v475, %v475
        %v881 = vmul.f32 %v524, %v524
        %v882 = vmul.f32 %v573, %v573
        %v883 = vmul.f32 %v622, %v622
        %v884 = vmul.f32 %v478, %v478
        %v885 = vmul.f32 %v527, %v527
        %v886 = vmul.f32 %v576, %v576
        %v887 = vmul.f32 %v625, %v625
        %v888 = vmul.f32 %v480, %v480
        %v889 = vmul.f32 %v529, %v529
        %v890 = vmul.f32 %v578, %v578
        %v891 = vmul.f32 %v627, %v627
        %v892 = vadd.f32 %v828, %v832
        %v893 = vadd.f32 %v892, %v836
        %v894 = vadd.f32 %v893, %v840
        %v895 = vadd.f32 %v894, %v844
        %v896 = vadd.f32 %v895, %v848
        %v897 = vadd.f32 %v896, %v852
        %v898 = vadd.f32 %v897, %v856
        %v899 = vadd.f32 %v898, %v860
        %v900 = vadd.f32 %v899, %v864
        %v901 = vadd.f32 %v900, %v868
        %v902 = vadd.f32 %v901, %v872
        %v903 = vadd.f32 %v902, %v876
        %v904 = vadd.f32 %v903, %v880
        %v905 = vadd.f32 %v904, %v884
        %v906 = vadd.f32 %v905, %v888
        %v907 = vrot.slane %v906, 4
        %v908 = vadd.f32 %v906, %v907
        %v909 = vrot.slane %v908, 2
        %v910 = vadd.f32 %v908, %v909
        %v911 = vrot.slane %v910, 1
        %v912 = vadd.f32 %v910, %v911
        %v913 = vadd.f32 %v829, %v833
        %v914 = vadd.f32 %v913, %v837
        %v915 = vadd.f32 %v914, %v841
        %v916 = vadd.f32 %v915, %v845
        %v917 = vadd.f32 %v916, %v849
        %v918 = vadd.f32 %v917, %v853
        %v919 = vadd.f32 %v918, %v857
        %v920 = vadd.f32 %v919, %v861
        %v921 = vadd.f32 %v920, %v865
        %v922 = vadd.f32 %v921, %v869
        %v923 = vadd.f32 %v922, %v873
        %v924 = vadd.f32 %v923, %v877
        %v925 = vadd.f32 %v924, %v881
        %v926 = vadd.f32 %v925, %v885
        %v927 = vadd.f32 %v926, %v889
        %v928 = vrot.slane %v927, 4
        %v929 = vadd.f32 %v927, %v928
        %v930 = vrot.slane %v929, 2
        %v931 = vadd.f32 %v929, %v930
        %v932 = vrot.slane %v931, 1
        %v933 = vadd.f32 %v931, %v932
        %v934 = vadd.f32 %v830, %v834
        %v935 = vadd.f32 %v934, %v838
        %v936 = vadd.f32 %v935, %v842
        %v937 = vadd.f32 %v936, %v846
        %v938 = vadd.f32 %v937, %v850
        %v939 = vadd.f32 %v938, %v854
        %v940 = vadd.f32 %v939, %v858
        %v941 = vadd.f32 %v940, %v862
        %v942 = vadd.f32 %v941, %v866
        %v943 = vadd.f32 %v942, %v870
        %v944 = vadd.f32 %v943, %v874
        %v945 = vadd.f32 %v944, %v878
        %v946 = vadd.f32 %v945, %v882
        %v947 = vadd.f32 %v946, %v886
        %v948 = vadd.f32 %v947, %v890
        %v949 = vrot.slane %v948, 4
        %v950 = vadd.f32 %v948, %v949
        %v951 = vrot.slane %v950, 2
        %v952 = vadd.f32 %v950, %v951
        %v953 = vrot.slane %v952, 1
        %v954 = vadd.f32 %v952, %v953
        %v955 = vadd.f32 %v831, %v835
        %v956 = vadd.f32 %v955, %v839
        %v957 = vadd.f32 %v956, %v843
        %v958 = vadd.f32 %v957, %v847
        %v959 = vadd.f32 %v958, %v851
        %v960 = vadd.f32 %v959, %v855
        %v961 = vadd.f32 %v960, %v859
        %v962 = vadd.f32 %v961, %v863
        %v963 = vadd.f32 %v962, %v867
        %v964 = vadd.f32 %v963, %v871
        %v965 = vadd.f32 %v964, %v875
        %v966 = vadd.f32 %v965, %v879
        %v967 = vadd.f32 %v966, %v883
        %v968 = vadd.f32 %v967, %v887
        %v969 = vadd.f32 %v968, %v891
        %v970 = vrot.slane %v969, 4
        %v971 = vadd.f32 %v969, %v970
        %v972 = vrot.slane %v971, 2
        %v973 = vadd.f32 %v971, %v972
        %v974 = vrot.slane %v973, 1
        %v975 = vadd.f32 %v973, %v974
        %v980 = vrot.slane %v933, 7
        %v981 = vrot.slane %v954, 6
        %v982 = vrot.slane %v975, 5
        %v983 = vsel %vm816, %v912, %v980
        %v984 = vsel %vm818, %v981, %v982
        %v985 = vsel %vm820, %v983, %v984
        %987 = vst.msk [vmem:[%s246] sm:$0xf] %vm826, %v985
        %s988 = sand.u32 %s81, 1
        %s989 = scalar_lea.sflag [#allocation3], %s988
        %s990 = sand.u32 %s81, 1
        %s991 = smul.addr %s990, 192
        %s992 = scalar_lea.vmem [#allocation2], %s991
        %s993 = sand.u32 %s26, 1
        %s994 = scalar_lea.sflag [#allocation5], %s993
        %s995 = sand.u32 %s107, 1
        %s996 = smul.addr %s995, 64
        %s997 = scalar_lea.vmem [#allocation4], %s996
        %s998 = sand.u32 %s26, 1
        %s999 = scalar_lea.sflag [#allocation5], %s998
        %s1000 = sand.u32 %s133, 1
        %s1001 = smul.addr %s1000, 4
        %s1002 = scalar_lea.vmem [#allocation6], %s1001
        %s1003 = sand.u32 %s159, 1
        %s1004 = scalar_lea.sflag [#allocation8], %s1003
        %s1005 = sand.u32 %s159, 1
        %s1006 = smul.addr %s1005, 4
        %s1007 = scalar_lea.vmem [#allocation7], %s1006
        // Predicated region
        $region29: #{tpu_custom_call.1} parent=27 // pred_check
          %p1008 = pneg %p91
        $region30: #{tpu_custom_call.1} parent=27 // pred_check_branch
          %1010 = sbr.rel (%p1008) target = $region32
        $region31: #{tpu_custom_call.1} parent=27 // pred_region
          %s1011 = smul.u32 16, %s26
          %1013 = vsyncadd %s989, 0
          %s1014 = smul.addr %s1011, 3
          %s1015 = smul.addr %s1014, 4
          %s1016 = scalar_lea.hbm %s2, %s1015
          %s1017 = sshll.u32 %s992, 4
          %s1018 = int_to_ptr.vmem [resolvable:$true] %s1017
          %s1019 = sshll.u32 %s1016, 4
          %s1020 = int_to_ptr.hbm [resolvable:$true] %s1019
          %1025 = dma.vmem_to_hbm [thread:$0]  %s1018, 3072, %s1020, %s989, 192, 192, 12
        $region32: #{tpu_custom_call.1} parent=27 // pred_fallthru
          _
        // Predicated region
        $region33: #{tpu_custom_call.1} parent=27 // pred_check
          %p1026 = pneg %p117
        $region34: #{tpu_custom_call.1} parent=27 // pred_check_branch
          %1028 = sbr.rel (%p1026) target = $region36
        $region35: #{tpu_custom_call.1} parent=27 // pred_region
          %s1029 = smul.u32 16, %s26
          %1031 = vsyncadd %s994, 0
          %s1032 = smul.addr %s1029, 4
          %s1033 = scalar_lea.hbm %s3, %s1032
          %s1034 = sshll.u32 %s997, 4
          %s1035 = int_to_ptr.vmem [resolvable:$true] %s1034
          %s1036 = sshll.u32 %s1033, 4
          %s1037 = int_to_ptr.hbm [resolvable:$true] %s1036
          %1042 = dma.vmem_to_hbm [thread:$0]  %s1035, 1024, %s1037, %s994, 64, 64, 4
        $region36: #{tpu_custom_call.1} parent=27 // pred_fallthru
          _
        // Predicated region
        $region37: #{tpu_custom_call.1} parent=27 // pred_check
          %p1043 = pneg %p143
        $region38: #{tpu_custom_call.1} parent=27 // pred_check_branch
          %1045 = sbr.rel (%p1043) target = $region40
        $region39: #{tpu_custom_call.1} parent=27 // pred_region
          %1047 = vsyncadd %s999, 0
          %s1048 = smul.addr %s26, 4
          %s1049 = scalar_lea.hbm %s4, %s1048
          %s1051 = sshll.u32 %s1002, 4
          %s1052 = int_to_ptr.vmem [resolvable:$true] %s1051
          %s1053 = sshll.u32 %s1049, 4
          %s1054 = int_to_ptr.hbm [resolvable:$true] %s1053
          %1056 = dma.vmem_to_hbm [thread:$0]  %s1052, 64, %s1054, %s999
        $region40: #{tpu_custom_call.1} parent=27 // pred_fallthru
          _
        // Predicated region
        $region41: #{tpu_custom_call.1} parent=27 // pred_check
          %p1057 = pneg %p169
        $region42: #{tpu_custom_call.1} parent=27 // pred_check_branch
          %1059 = sbr.rel (%p1057) target = $region44
        $region43: #{tpu_custom_call.1} parent=27 // pred_region
          %1061 = vsyncadd %s1004, 0
          %s1062 = smul.addr %s26, 4
          %s1063 = scalar_lea.hbm %s5, %s1062
          %s1065 = sshll.u32 %s1007, 4
          %s1066 = int_to_ptr.vmem [resolvable:$true] %s1065
          %s1067 = sshll.u32 %s1063, 4
          %s1068 = int_to_ptr.hbm [resolvable:$true] %s1067
          %1070 = dma.vmem_to_hbm [thread:$0]  %s1066, 64, %s1068, %s1004
        $region44: #{tpu_custom_call.1} parent=27 // pred_fallthru
          _
      $region28: #{tpu_custom_call.1} parent=5 // pred_fallthru
        _
      %p1071 = scmp.le.s32.totalorder 2, %s21
      // Predicated region
      $region45: #{tpu_custom_call.1} parent=5 // pred_check
        %p1072 = pneg %p1071
      $region46: #{tpu_custom_call.1} parent=5 // pred_check_branch
        %1074 = sbr.rel (%p1072) target = $region48
      $region47: #{tpu_custom_call.1} parent=5 // pred_region
        %s1075 = ssub.s32 %s21, 2
        // Predicated region
        $region49: #{tpu_custom_call.1} parent=47 // pred_check
          %p1076 = pneg %p97
        $region50: #{tpu_custom_call.1} parent=47 // pred_check_branch
          %1078 = sbr.rel (%p1076) target = $region52
        $region51: #{tpu_custom_call.1} parent=47 // pred_region
          %s1079 = sand.u32 %s82, 1
          %s1080 = scalar_lea.sflag [#allocation3], %s1079
          %s1081 = sand.u32 %s82, 1
          %s1082 = smul.addr %s1081, 192
          %s1083 = scalar_lea.vmem [#allocation2], %s1082
          %1085 = dma.done %s1080, 3072
        $region52: #{tpu_custom_call.1} parent=47 // pred_fallthru
          _
        // Predicated region
        $region53: #{tpu_custom_call.1} parent=47 // pred_check
          %p1086 = pneg %p123
        $region54: #{tpu_custom_call.1} parent=47 // pred_check_branch
          %1088 = sbr.rel (%p1086) target = $region56
        $region55: #{tpu_custom_call.1} parent=47 // pred_region
          %s1089 = sand.u32 %s27, 1
          %s1090 = scalar_lea.sflag [#allocation5], %s1089
          %s1091 = sand.u32 %s108, 1
          %s1092 = smul.addr %s1091, 64
          %s1093 = scalar_lea.vmem [#allocation4], %s1092
          %1095 = dma.done %s1090, 1024
        $region56: #{tpu_custom_call.1} parent=47 // pred_fallthru
          _
        // Predicated region
        $region57: #{tpu_custom_call.1} parent=47 // pred_check
          %p1096 = pneg %p149
        $region58: #{tpu_custom_call.1} parent=47 // pred_check_branch
          %1098 = sbr.rel (%p1096) target = $region60
        $region59: #{tpu_custom_call.1} parent=47 // pred_region
          %s1099 = sand.u32 %s27, 1
          %s1100 = scalar_lea.sflag [#allocation5], %s1099
          %s1101 = sand.u32 %s134, 1
          %s1102 = smul.addr %s1101, 4
          %s1103 = scalar_lea.vmem [#allocation6], %s1102
          %1105 = dma.done %s1100, 64
        $region60: #{tpu_custom_call.1} parent=47 // pred_fallthru
          _
        // Predicated region
        $region61: #{tpu_custom_call.1} parent=47 // pred_check
          %p1106 = pneg %p175
        $region62: #{tpu_custom_call.1} parent=47 // pred_check_branch
          %1108 = sbr.rel (%p1106) target = $region64
        $region63: #{tpu_custom_call.1} parent=47 // pred_region
          %s1109 = sand.u32 %s160, 1
          %s1110 = scalar_lea.sflag [#allocation8], %s1109
          %s1111 = sand.u32 %s160, 1
          %s1112 = smul.addr %s1111, 4
          %s1113 = scalar_lea.vmem [#allocation7], %s1112
          %1115 = dma.done %s1110, 64
        $region64: #{tpu_custom_call.1} parent=47 // pred_fallthru
          _
      $region48: #{tpu_custom_call.1} parent=5 // pred_fallthru
        _
    $region6: #{tpu_custom_call.1} parent=1 // loop_footer
      %s25 = sadd.s32 1, %s21
    $region7: #{tpu_custom_call.1} parent=1 // loop_footer_branch
      %20 = sbr.rel target = $region3
    $region8: #{tpu_custom_call.1} parent=1 // loop_exit
      _
    %1116 = vsyncpa [#allocation3], 1
    %s1117 = scalar_lea.sflag [#allocation3], 1
    %1118 = vsyncpa %s1117, 1
    %1119 = vsyncpa [#allocation5], 1
    %s1120 = scalar_lea.sflag [#allocation5], 1
    %1121 = vsyncpa %s1120, 1
    %1122 = vsyncpa [#allocation8], 1
    %s1123 = scalar_lea.sflag [#allocation8], 1
    %1124 = vsyncpa %s1123, 1

</llo_original>
